<compile_context>
chip_gen: v7x
topology: tpu7x:2x2x1
jax: 0.10.0
libtpu: 0.0.40
codegen_flags: <defaults>
</compile_context>

<pallas_src>
import functools

import jax
import jax.numpy as jnp
from jax.experimental import pallas as pl
from jax.experimental.pallas import tpu as pltpu

_LANE = 128
_SUBLANE = 8
_MAX_TILE_B = 512


def _round_up(x, m):
    return ((x + m - 1) // m) * m


def _qactor_kernel(activation, state_ref, ap_ref, *refs):
    """refs = (w0_state, w0_ap, b0, w1, b1, ..., wL, bL, q_ref).

    All weight/bias refs are whole-array VMEM residents; state/ap/q are batch
    tiles.  Hidden layers: matmul + bias + activation; final layer: matmul +
    bias only (Q-values, zero-padded to a 128-lane multiple).
    """
    q_ref = refs[-1]
    wb = refs[:-1]
    negative_slope = 0.01

    def act(x):
        if activation == "relu":
            return jnp.maximum(x, 0.0)
        elif activation == "leaky_relu":
            return jnp.where(x >= 0.0, x, negative_slope * x)
        raise ValueError("Unknown activation function " + str(activation))

    # Layer 0: split matmul replaces the wrapper-side concat.
    #   x @ W0 == state @ W0[:S] + action_parameters @ W0[S:]
    x = (jnp.dot(state_ref[...], wb[0][...], preferred_element_type=jnp.float32)
         + jnp.dot(ap_ref[...], wb[1][...], preferred_element_type=jnp.float32)
         + wb[2][...])

    n_rest = (len(wb) - 3) // 2        # number of layers after layer 0
    if n_rest >= 1:                    # layer 0 is a hidden layer
        x = act(x)

    # Remaining layers (short static Python loop; 1-3 layers typical).
    for i in range(n_rest):
        w = wb[3 + 2 * i][...]
        b = wb[3 + 2 * i + 1][...]
        x = jnp.dot(x, w, preferred_element_type=jnp.float32) + b
        if i != n_rest - 1:            # not the output layer
            x = act(x)

    q_ref[...] = x


def prepare_qactor_params(weights, biases, state_size, action_size):
    """One-time parameter prep (hoisted out of the per-call path).

    weights[i]: [in_i, out_i]  (hidden layers ... output layer)
    biases[i]:  [out_i]

    Returns a flat list [w0_state, w0_ap, b0, w1, b1, ..., wL, bL] with
      - everything cast to float32,
      - W0 split across the (state | action_parameters) concat boundary,
      - biases reshaped to (1, out),
      - the final layer's output dim zero-padded to a 128-lane multiple.
    """
    ws = [jnp.asarray(w, jnp.float32) for w in weights]
    bs = [jnp.asarray(b, jnp.float32) for b in biases]

    out_padded = _round_up(action_size, _LANE)
    pad = out_padded - action_size
    if pad:
        ws[-1] = jnp.pad(ws[-1], ((0, 0), (0, pad)))
        bs[-1] = jnp.pad(bs[-1], ((0, pad),))

    params = [ws[0][:state_size], ws[0][state_size:], bs[0].reshape(1, -1)]
    for w, b in zip(ws[1:], bs[1:]):
        params.append(w)
        params.append(b.reshape(1, -1))
    return params


def qactor_forward(state, action_parameters, params, action_size,
                   activation="relu"):
    """Pallas-backed forward pass of QActor.

    state:              [B, state_size]
    action_parameters:  [B, action_parameter_size]
    params:             output of prepare_qactor_params()
    returns Q:          [B, action_size] float32
    """
    state = state.astype(jnp.float32)
    action_parameters = action_parameters.astype(jnp.float32)
    batch = state.shape[0]
    s_dim = state.shape[1]
    p_dim = action_parameters.shape[1]
    out_padded = params[-1].shape[1]   # padded output width of final layer

    # Batch tiling: large tiles amortize per-step overhead and enable the
    # double-buffered pipeline; VMEM use is independent of B.
    if batch <= _MAX_TILE_B:
        tile_b = batch                 # full-dim block: no (8,) divisibility needed
    else:
        tile_b = _MAX_TILE_B           # multiple of 8; ragged last tile is masked
    grid = (pl.cdiv(batch, tile_b),)

    x_specs = [
        pl.BlockSpec((tile_b, s_dim), lambda i: (i, 0)),
        pl.BlockSpec((tile_b, p_dim), lambda i: (i, 0)),
    ]
    # Weights / biases: whole-array blocks with constant index_map -> stay
    # resident in VMEM across all batch tiles (no re-DMA per grid step).
    w_specs = [pl.BlockSpec(p.shape, lambda i: (0, 0)) for p in params]
    out_spec = pl.BlockSpec((tile_b, out_padded), lambda i: (i, 0))

    kernel = functools.partial(_qactor_kernel, activation)

    q_padded = pl.pallas_call(
        kernel,
        out_shape=jax.ShapeDtypeStruct((batch, out_padded), jnp.float32),
        grid=grid,
        in_specs=x_specs + w_specs,
        out_specs=out_spec,
        compiler_params=pltpu.CompilerParams(
            dimension_semantics=("parallel",)),
    )(state, action_parameters, *params)

    return q_padded[:, :action_size]


def init_qactor_params(key, state_size, action_size, action_parameter_size,
                       hidden_layers=(32,), activation="relu",
                       output_layer_init_std=None):
    """Deterministic parameter init mirroring QActor.__init__ (shapes only).

    Weights are stored as [in, out] (transposed vs. PyTorch's [out, in]).
    """
    sizes = [state_size + action_parameter_size] + list(hidden_layers) + [action_size]
    weights, biases = [], []
    keys = jax.random.split(key, len(sizes) - 1)
    gain = jnp.sqrt(2.0) if activation == "relu" else jnp.sqrt(2.0 / (1.0 + 0.01 ** 2))
    for i in range(len(sizes) - 1):
        fan_in, fan_out = sizes[i], sizes[i + 1]
        is_last = i == len(sizes) - 2
        if not is_last:
            # kaiming_normal_: std = gain / sqrt(fan_in)
            std = gain / jnp.sqrt(jnp.float32(fan_in))
            w = std * jax.random.normal(keys[i], (fan_in, fan_out), jnp.float32)
        else:
            if output_layer_init_std is not None:
                w = output_layer_init_std * jax.random.normal(
                    keys[i], (fan_in, fan_out), jnp.float32)
            else:
                # PyTorch Linear default: U(-1/sqrt(fan_in), 1/sqrt(fan_in))
                bound = 1.0 / jnp.sqrt(jnp.float32(fan_in))
                w = jax.random.uniform(keys[i], (fan_in, fan_out), jnp.float32,
                                       minval=-bound, maxval=bound)
        b = jnp.zeros((fan_out,), jnp.float32)
        weights.append(w)
        biases.append(b)
    return weights, biases


def _reference_forward(state, action_parameters, weights, biases,
                       activation="relu"):
    x = jnp.concatenate([state, action_parameters], axis=1).astype(jnp.float32)
    for w, b in zip(weights[:-1], biases[:-1]):
        x = x @ w + b
        if activation == "relu":
            x = jnp.maximum(x, 0.0)
        else:
            x = jnp.where(x >= 0, x, 0.01 * x)
    return x @ weights[-1] + biases[-1]


if __name__ == "__main__":
    key = jax.random.PRNGKey(0)

    # --- Small-shape test (shapes consistent with the module's forward) ---
    batch = 8
    state_size = 12
    action_parameter_size = 20
    action_size = 8
    hidden_layers = (32,)
    activation = "relu"

    k_state, k_ap, k_params, k2 = jax.random.split(key, 4)
    state = jax.random.normal(k_state, (batch, state_size), jnp.float32)
    action_parameters = jax.random.normal(
        k_ap, (batch, action_parameter_size), jnp.float32)

    weights, biases = init_qactor_params(
        k_params, state_size, action_size, action_parameter_size,
        hidden_layers=hidden_layers, activation=activation)
    params = prepare_qactor_params(weights, biases, state_size, action_size)

    q = qactor_forward(state, action_parameters, params, action_size, activation)
    q = jax.block_until_ready(q)
    q_ref = _reference_forward(state, action_parameters, weights, biases, activation)
    assert q.shape == (batch, action_size)
    assert jnp.allclose(q, q_ref, atol=1e-5, rtol=1e-5)

    # --- Larger ragged-batch test: exercises the batch grid + partial tile ---
    batch2 = 1000
    hidden2 = (64, 64)
    activation2 = "leaky_relu"
    ks, ka, kp = jax.random.split(k2, 3)
    state2 = jax.random.normal(ks, (batch2, state_size), jnp.float32)
    ap2 = jax.random.normal(ka, (batch2, action_parameter_size), jnp.float32)
    w2, b2 = init_qactor_params(
        kp, state_size, action_size, action_parameter_size,
        hidden_layers=hidden2, activation=activation2)
    params2 = prepare_qactor_params(w2, b2, state_size, action_size)

    q2 = qactor_forward(state2, ap2, params2, action_size, activation2)
    q2 = jax.block_until_ready(q2)
    q2_ref = _reference_forward(state2, ap2, w2, b2, activation2)
    assert q2.shape == (batch2, action_size)
    assert jnp.allclose(q2, q2_ref, atol=1e-4, rtol=1e-4)

    print("KERNEL_OK")
</pallas_src>

<mosaic_0001>
module attributes {stable_mosaic.version = 11 : i64} {
  func.func @_qactor_kernel(%arg0: i32, %arg1: memref<8x12xf32, #tpu.memory_space<vmem>>, %arg2: memref<8x20xf32, #tpu.memory_space<vmem>>, %arg3: memref<12x32xf32, #tpu.memory_space<vmem>>, %arg4: memref<20x32xf32, #tpu.memory_space<vmem>>, %arg5: memref<1x32xf32, #tpu.memory_space<vmem>>, %arg6: memref<32x128xf32, #tpu.memory_space<vmem>>, %arg7: memref<1x128xf32, #tpu.memory_space<vmem>>, %arg8: memref<8x128xf32, #tpu.memory_space<vmem>>) attributes {dimension_semantics = [#tpu.dimension_semantics<parallel>], iteration_bounds = array<i64: 1>, scalar_prefetch = 0 : i64, scratch_operands = 0 : i64, tpu.core_type = #tpu.core_type<tc>, window_params = [{transform_indices = @transform_0, window_bounds = array<i64: 8, 12>}, {transform_indices = @transform_1, window_bounds = array<i64: 8, 20>}, {pipeline_mode = #tpu.pipeline_mode<synchronous>, transform_indices = @transform_2, window_bounds = array<i64: 12, 32>}, {pipeline_mode = #tpu.pipeline_mode<synchronous>, transform_indices = @transform_3, window_bounds = array<i64: 20, 32>}, {pipeline_mode = #tpu.pipeline_mode<synchronous>, transform_indices = @transform_4, window_bounds = array<i64: 1, 32>}, {pipeline_mode = #tpu.pipeline_mode<synchronous>, transform_indices = @transform_5, window_bounds = array<i64: 32, 128>}, {pipeline_mode = #tpu.pipeline_mode<synchronous>, transform_indices = @transform_6, window_bounds = array<i64: 1, 128>}, {transform_indices = @transform_7, window_bounds = array<i64: 8, 128>}]} {
    %c0 = arith.constant 0 : index
    %c0_0 = arith.constant 0 : index
    %0 = vector.load %arg1[%c0, %c0_0] : memref<8x12xf32, #tpu.memory_space<vmem>>, vector<8x12xf32>
    %c0_1 = arith.constant 0 : index
    %c0_2 = arith.constant 0 : index
    %1 = vector.load %arg3[%c0_1, %c0_2] : memref<12x32xf32, #tpu.memory_space<vmem>>, vector<12x32xf32>
    %cst = arith.constant dense<0.000000e+00> : vector<8x32xf32>
    %2 = tpu.matmul %0, %1, %cst {dimension_numbers = #tpu.dot_dimension_numbers<[1], [0], [0], [1], [0, 0, 1, 1], [], []>} : vector<8x12xf32>, vector<12x32xf32>, vector<8x32xf32> -> vector<8x32xf32>
    %c0_3 = arith.constant 0 : index
    %c0_4 = arith.constant 0 : index
    %3 = vector.load %arg2[%c0_3, %c0_4] : memref<8x20xf32, #tpu.memory_space<vmem>>, vector<8x20xf32>
    %c0_5 = arith.constant 0 : index
    %c0_6 = arith.constant 0 : index
    %4 = vector.load %arg4[%c0_5, %c0_6] : memref<20x32xf32, #tpu.memory_space<vmem>>, vector<20x32xf32>
    %cst_7 = arith.constant dense<0.000000e+00> : vector<8x32xf32>
    %5 = tpu.matmul %3, %4, %cst_7 {dimension_numbers = #tpu.dot_dimension_numbers<[1], [0], [0], [1], [0, 0, 1, 1], [], []>} : vector<8x20xf32>, vector<20x32xf32>, vector<8x32xf32> -> vector<8x32xf32>
    %6 = arith.addf %2, %5 : vector<8x32xf32>
    %c0_8 = arith.constant 0 : index
    %c0_9 = arith.constant 0 : index
    %7 = vector.load %arg5[%c0_8, %c0_9] : memref<1x32xf32, #tpu.memory_space<vmem>>, vector<1x32xf32>
    %8 = vector.broadcast %7 : vector<1x32xf32> to vector<8x32xf32>
    %9 = arith.addf %6, %8 : vector<8x32xf32>
    %cst_10 = arith.constant 0.000000e+00 : f32
    %10 = vector.broadcast %cst_10 : f32 to vector<8x32xf32>
    %11 = arith.maximumf %9, %10 : vector<8x32xf32>
    %c0_11 = arith.constant 0 : index
    %c0_12 = arith.constant 0 : index
    %12 = vector.load %arg6[%c0_11, %c0_12] : memref<32x128xf32, #tpu.memory_space<vmem>>, vector<32x128xf32>
    %c0_13 = arith.constant 0 : index
    %c0_14 = arith.constant 0 : index
    %13 = vector.load %arg7[%c0_13, %c0_14] : memref<1x128xf32, #tpu.memory_space<vmem>>, vector<1x128xf32>
    %cst_15 = arith.constant dense<0.000000e+00> : vector<8x128xf32>
    %14 = tpu.matmul %11, %12, %cst_15 {dimension_numbers = #tpu.dot_dimension_numbers<[1], [0], [0], [1], [0, 0, 1, 1], [], []>} : vector<8x32xf32>, vector<32x128xf32>, vector<8x128xf32> -> vector<8x128xf32>
    %15 = vector.broadcast %13 : vector<1x128xf32> to vector<8x128xf32>
    %16 = arith.addf %14, %15 : vector<8x128xf32>
    %c0_16 = arith.constant 0 : index
    %c0_17 = arith.constant 0 : index
    %17 = vector.load %arg8[%c0_16, %c0_17] : memref<8x128xf32, #tpu.memory_space<vmem>>, vector<8x128xf32>
    tpu.vector_store %arg8[%c0_16, %c0_17], %16 {strides = array<i32>} : memref<8x128xf32, #tpu.memory_space<vmem>>, vector<8x128xf32>,
    return
  }
  func.func @transform_0(%arg0: i32) -> (i32, i32) {
    %c0_i32 = arith.constant 0 : i32
    %c0_i32_0 = arith.constant 0 : i32
    return %arg0, %c0_i32 : i32, i32
  }
  func.func @transform_1(%arg0: i32) -> (i32, i32) {
    %c0_i32 = arith.constant 0 : i32
    %c0_i32_0 = arith.constant 0 : i32
    return %arg0, %c0_i32 : i32, i32
  }
  func.func @transform_2(%arg0: i32) -> (i32, i32) {
    %c0_i32 = arith.constant 0 : i32
    %c0_i32_0 = arith.constant 0 : i32
    %c0_i32_1 = arith.constant 0 : i32
    return %c0_i32, %c0_i32_0 : i32, i32
  }
  func.func @transform_3(%arg0: i32) -> (i32, i32) {
    %c0_i32 = arith.constant 0 : i32
    %c0_i32_0 = arith.constant 0 : i32
    %c0_i32_1 = arith.constant 0 : i32
    return %c0_i32, %c0_i32_0 : i32, i32
  }
  func.func @transform_4(%arg0: i32) -> (i32, i32) {
    %c0_i32 = arith.constant 0 : i32
    %c0_i32_0 = arith.constant 0 : i32
    %c0_i32_1 = arith.constant 0 : i32
    return %c0_i32, %c0_i32_0 : i32, i32
  }
  func.func @transform_5(%arg0: i32) -> (i32, i32) {
    %c0_i32 = arith.constant 0 : i32
    %c0_i32_0 = arith.constant 0 : i32
    %c0_i32_1 = arith.constant 0 : i32
    return %c0_i32, %c0_i32_0 : i32, i32
  }
  func.func @transform_6(%arg0: i32) -> (i32, i32) {
    %c0_i32 = arith.constant 0 : i32
    %c0_i32_0 = arith.constant 0 : i32
    %c0_i32_1 = arith.constant 0 : i32
    return %c0_i32, %c0_i32_0 : i32, i32
  }
  func.func @transform_7(%arg0: i32) -> (i32, i32) {
    %c0_i32 = arith.constant 0 : i32
    %c0_i32_0 = arith.constant 0 : i32
    return %arg0, %c0_i32 : i32, i32
  }
}

</mosaic_0001>

<llo_original>
// kernel: tpu_custom_call.1
$region0: #{tpu_custom_call.1}
  #allocation0 [shape = 'u32[]', space=smem, size = 0x4, offset = 0x4, fixed_abs, tag = 'smem constant byte address 0x4 - core index']
  #allocation1 [shape = 'u32[144,128]{1,0:T(1,128)}', space=vmem, size = 0x12000, scoped, tag = 'internal scratch']
  %s0 = inlined_call_operand.hbm [shape: f32[8,12], index: 0, kind: input, shape index: {}]
  %s1 = inlined_call_operand.hbm [shape: f32[8,20], index: 1, kind: input, shape index: {}]
  %s2 = inlined_call_operand.hbm [shape: f32[12,32], index: 2, kind: input, shape index: {}]
  %s3 = inlined_call_operand.hbm [shape: f32[20,32], index: 3, kind: input, shape index: {}]
  %s4 = inlined_call_operand.vmem [shape: f32[1,32], index: 4, kind: input, shape index: {}]
  %s5 = inlined_call_operand.hbm [shape: f32[32,128], index: 5, kind: input, shape index: {}]
  %s6 = inlined_call_operand.vmem [shape: f32[1,128], index: 6, kind: input, shape index: {}]
  %s7 = inlined_call_operand.hbm [shape: f32[8,128], index: 7, kind: output, shape index: {}]
  %s8 = sld [smem:[#allocation0]]
  $region58: #{tpu_custom_call.1} parent=0
    _
  %s10 = ssub.s32 1, %s8
  %s11 = scalar_select 0, %s10, %s8
  $region1: #{tpu_custom_call.1} parent=0
    #allocation2 [shape = 'u8[4096]{0}', space=vmem, size = 0x1000, scoped, tag = 'input window, operand 0, single buffered']
    #allocation3 [shape = 's32[1]{0}', space=sflag, size = 0x4, scoped, tag = 'scoped memory for tpu_custom_call.1']
    #allocation4 [shape = 's32[1]{0}', space=sflag, size = 0x4, scoped, tag = 'scoped memory for tpu_custom_call.1']
    #allocation5 [shape = 'u8[4096]{0}', space=vmem, size = 0x1000, scoped, tag = 'input window, operand 1, single buffered']
    #allocation6 [shape = 's32[1]{0}', space=sflag, size = 0x4, scoped, tag = 'scoped memory for tpu_custom_call.1']
    #allocation7 [shape = 'u8[8192]{0}', space=vmem, size = 0x2000, scoped, tag = 'input window, operand 2, single buffered']
    #allocation8 [shape = 'u8[12288]{0}', space=vmem, size = 0x3000, scoped, tag = 'input window, operand 3, single buffered']
    #allocation9 [shape = 's32[1]{0}', space=sflag, size = 0x4, scoped, tag = 'scoped memory for tpu_custom_call.1']
    #allocation10 [shape = 'u8[16384]{0}', space=vmem, size = 0x4000, scoped, tag = 'input window, operand 5, single buffered']
    #allocation11 [shape = 'u8[4096]{0}', space=vmem, size = 0x1000, scoped, tag = 'output window, operand 0, single buffered']
    %12 = vsyncpa [#allocation3], 0
    %13 = vsyncpa [#allocation6], 0
    %14 = vsyncpa [#allocation9], 0
    %15 = vsyncpa [#allocation4], 0
    // Predicated region
    $region2: #{tpu_custom_call.1} parent=1 // pred_check
      _
    $region3: #{tpu_custom_call.1} parent=1 // pred_check_branch
      %17 = sbr.rel (0) target = $region5
    $region4: #{tpu_custom_call.1} parent=1 // pred_region
      %s19 = ssub.s32 128, 128
      %20 = vsyncadd [#allocation3], %s19
      %s22 = sshll.u32 [#allocation2], 4
      %s23 = int_to_ptr.vmem [resolvable:$true] %s22
      %25 = dma.hbm_to_vmem [thread:$0]  %s0, 128, %s23, [#allocation3]
    $region5: #{tpu_custom_call.1} parent=1 // pred_fallthru
      _
    // Predicated region
    $region6: #{tpu_custom_call.1} parent=1 // pred_check
      _
    $region7: #{tpu_custom_call.1} parent=1 // pred_check_branch
      %27 = sbr.rel (0) target = $region9
    $region8: #{tpu_custom_call.1} parent=1 // pred_region
      %s29 = ssub.s32 128, 128
      %30 = vsyncadd [#allocation6], %s29
      %s32 = sshll.u32 [#allocation5], 4
      %s33 = int_to_ptr.vmem [resolvable:$true] %s32
      %35 = dma.hbm_to_vmem [thread:$0]  %s1, 128, %s33, [#allocation6]
    $region9: #{tpu_custom_call.1} parent=1 // pred_fallthru
      _
    // Predicated region
    $region10: #{tpu_custom_call.1} parent=1 // pred_check
      _
    $region11: #{tpu_custom_call.1} parent=1 // pred_check_branch
      %37 = sbr.rel (0) target = $region13
    $region12: #{tpu_custom_call.1} parent=1 // pred_region
      %s39 = ssub.s32 256, 256
      %40 = vsyncadd [#allocation6], %s39
      %s41 = sshll.u32 [#allocation7], 4
      %s42 = int_to_ptr.vmem [resolvable:$true] %s41
      %47 = dma.hbm_to_vmem [thread:$0]  %s2, 256, %s42, [#allocation6], 128, 128, 8
    $region13: #{tpu_custom_call.1} parent=1 // pred_fallthru
      _
    // Predicated region
    $region14: #{tpu_custom_call.1} parent=1 // pred_check
      _
    $region15: #{tpu_custom_call.1} parent=1 // pred_check_branch
      %49 = sbr.rel (0) target = $region17
    $region16: #{tpu_custom_call.1} parent=1 // pred_region
      %s51 = ssub.s32 384, 384
      %52 = vsyncadd [#allocation9], %s51
      %s53 = sshll.u32 [#allocation8], 4
      %s54 = int_to_ptr.vmem [resolvable:$true] %s53
      %59 = dma.hbm_to_vmem [thread:$0]  %s3, 384, %s54, [#allocation9], 128, 128, 8
    $region17: #{tpu_custom_call.1} parent=1 // pred_fallthru
      _
    // Predicated region
    $region18: #{tpu_custom_call.1} parent=1 // pred_check
      _
    $region19: #{tpu_custom_call.1} parent=1 // pred_check_branch
      %61 = sbr.rel (0) target = $region21
    $region20: #{tpu_custom_call.1} parent=1 // pred_region
      _
    $region21: #{tpu_custom_call.1} parent=1 // pred_fallthru
      _
    // Predicated region
    $region22: #{tpu_custom_call.1} parent=1 // pred_check
      _
    $region23: #{tpu_custom_call.1} parent=1 // pred_check_branch
      %63 = sbr.rel (0) target = $region25
    $region24: #{tpu_custom_call.1} parent=1 // pred_region
      %s65 = ssub.s32 512, 512
      %66 = vsyncadd [#allocation9], %s65
      %s67 = sshll.u32 [#allocation10], 4
      %s68 = int_to_ptr.vmem [resolvable:$true] %s67
      %73 = dma.hbm_to_vmem [thread:$0]  %s5, 512, %s68, [#allocation9], 128, 128, 8
    $region25: #{tpu_custom_call.1} parent=1 // pred_fallthru
      _
    // Predicated region
    $region26: #{tpu_custom_call.1} parent=1 // pred_check
      _
    $region27: #{tpu_custom_call.1} parent=1 // pred_check_branch
      %75 = sbr.rel (0) target = $region29
    $region28: #{tpu_custom_call.1} parent=1 // pred_region
      _
    $region29: #{tpu_custom_call.1} parent=1 // pred_fallthru
      _
    // Predicated region
    $region30: #{tpu_custom_call.1} parent=1 // pred_check
      _
    $region31: #{tpu_custom_call.1} parent=1 // pred_check_branch
      %77 = sbr.rel (0) target = $region33
    $region32: #{tpu_custom_call.1} parent=1 // pred_region
      %78 = dma.done [#allocation3], 128
    $region33: #{tpu_custom_call.1} parent=1 // pred_fallthru
      _
    // Predicated region
    $region34: #{tpu_custom_call.1} parent=1 // pred_check
      _
    $region35: #{tpu_custom_call.1} parent=1 // pred_check_branch
      %80 = sbr.rel (0) target = $region37
    $region36: #{tpu_custom_call.1} parent=1 // pred_region
      %81 = dma.done [#allocation6], 128
    $region37: #{tpu_custom_call.1} parent=1 // pred_fallthru
      _
    // Predicated region
    $region38: #{tpu_custom_call.1} parent=1 // pred_check
      _
    $region39: #{tpu_custom_call.1} parent=1 // pred_check_branch
      %83 = sbr.rel (0) target = $region41
    $region40: #{tpu_custom_call.1} parent=1 // pred_region
      %84 = dma.done [#allocation6], 256
    $region41: #{tpu_custom_call.1} parent=1 // pred_fallthru
      _
    // Predicated region
    $region42: #{tpu_custom_call.1} parent=1 // pred_check
      _
    $region43: #{tpu_custom_call.1} parent=1 // pred_check_branch
      %86 = sbr.rel (0) target = $region45
    $region44: #{tpu_custom_call.1} parent=1 // pred_region
      %87 = dma.done [#allocation9], 384
    $region45: #{tpu_custom_call.1} parent=1 // pred_fallthru
      _
    // Predicated region
    $region46: #{tpu_custom_call.1} parent=1 // pred_check
      _
    $region47: #{tpu_custom_call.1} parent=1 // pred_check_branch
      %89 = sbr.rel (0) target = $region49
    $region48: #{tpu_custom_call.1} parent=1 // pred_region
      %90 = dma.done [#allocation9], 512
    $region49: #{tpu_custom_call.1} parent=1 // pred_fallthru
      _
    %v91 = vld [vmem:[#allocation2] sm:$0xff]
    %v92 = vld [vmem:[#allocation7] sm:$0xff]
    %v93 = vld [vmem:[#allocation7 + $0x8] sm:$0xf]
    %v94 = vld [vmem:[#allocation5] sm:$0xff]
    %v95 = vld [vmem:[#allocation8] sm:$0xff]
    %v96 = vld [vmem:[#allocation8 + $0x8] sm:$0xff]
    %v97 = vld [vmem:[#allocation8 + $0x10] sm:$0xf]
    %vm98 = vcmask 162816
    %v100 = vsel %vm98, %v94, 0
    %vm102 = vcmask 1043456
    %v104 = vsel %vm102, %v97, 0
    %106 = vmatprep.subr.mxu0 0.0
    %107 = vmatpush1.msra.mxu0 %v95
    %108 = vmatprep.subr.mxu0 0.0
    %109 = vmatpush1.msra.mxu0 %v96
    %110 = vmatprep.subr.mxu0 0.0
    %111 = vmatpush1.msra.mxu0 %v104
    %112 = vmatprep.subr.mxu0 0.0
    %113 = vmatpush1.msra.mxu0 0.0
    %114 = vmatprep.subr.mxu0 0.0
    %115 = vmatpush1.msra.mxu0 0.0
    %116 = vmatprep.subr.mxu0 0.0
    %117 = vmatpush1.msra.mxu0 0.0
    %118 = vmatprep.subr.mxu0 0.0
    %119 = vmatpush1.msra.mxu0 0.0
    %120 = vmatprep.subr.mxu0 0.0
    %121 = vmatpush1.msra.mxu0 0.0
    %122 = vmatprep.subr.mxu0 0.0
    %123 = vmatpush1.msra.mxu0 0.0
    %124 = vmatprep.subr.mxu0 0.0
    %125 = vmatpush1.msra.mxu0 0.0
    %126 = vmatprep.subr.mxu0 0.0
    %127 = vmatpush1.msra.mxu0 0.0
    %128 = vmatprep.subr.mxu0 0.0
    %129 = vmatpush1.msra.mxu0 0.0
    %130 = vmatprep.subr.mxu0 0.0
    %131 = vmatpush1.msra.mxu0 0.0
    %132 = vmatprep.subr.mxu0 0.0
    %133 = vmatpush1.msra.mxu0 0.0
    %134 = vmatprep.subr.mxu0 0.0
    %135 = vmatpush1.msra.mxu0 0.0
    %136 = vmatprep.subr.mxu0 0.0
    %137 = vmatpush1.msra.mxu0 0.0
    %138 = vmatprep.subr.mxu0 0.0
    %139 = vmatpush1.msra.mxu0 0.0
    %140 = vmatprep.subr.mxu0 0.0
    %141 = vmatpush1.msra.mxu0 0.0
    %142 = vmatprep.subr.mxu0 0.0
    %143 = vmatpush1.msra.mxu0 0.0
    %144 = vmatprep.subr.mxu0 0.0
    %145 = vmatpush1.msra.mxu0 0.0
    %146 = vmatprep.subr.mxu0 0.0
    %147 = vmatpush1.msra.mxu0 0.0
    %148 = vmatprep.subr.mxu0 0.0
    %149 = vmatpush1.msra.mxu0 0.0
    %150 = vmatprep.subr.mxu0 0.0
    %151 = vmatpush1.msra.mxu0 0.0
    %152 = vmatprep.subr.mxu0 0.0
    %153 = vmatpush1.msra.mxu0 0.0
    %154 = vmatprep.subr.mxu0 0.0
    %155 = vmatpush1.msra.mxu0 0.0
    %156 = vmatprep.subr.mxu0 0.0
    %157 = vmatpush1.msra.mxu0 0.0
    %158 = vmatprep.subr.mxu0 0.0
    %159 = vmatpush1.msra.mxu0 0.0
    %160 = vmatprep.subr.mxu0 0.0
    %161 = vmatpush1.msra.mxu0 0.0
    %162 = vmatprep.subr.mxu0 0.0
    %163 = vmatpush1.msra.mxu0 0.0
    %164 = vmatprep.subr.mxu0 0.0
    %165 = vmatpush1.msra.mxu0 0.0
    %166 = vmatprep.subr.mxu0 0.0
    %167 = vmatpush1.msra.mxu0 0.0
    %168 = vmatprep.subr.mxu0 0.0
    %169 = vmatpush1.msra.mxu0 0.0
    %170 = vmatprep.mubr.f32.mxu0 0.0
    %171 = vmatmul.mubr.f32.gmra.mrb[0].mxu0 %v100
    %v172 = vpop.f32.mrb[0].mxu0
    %v173 = vadd.f32 0.0, %v172
    %v174 = vpop.f32.mrb[0].mxu0
    %175 = vdwg.mxu0
    %vm176 = vcmask 97280
    %v178 = vsel %vm176, %v91, 0
    %v181 = vsel %vm102, %v93, 0
    %183 = vmatprep.subr.mxu0 0.0
    %184 = vmatpush1.msra.mxu0 %v92
    %185 = vmatprep.subr.mxu0 0.0
    %186 = vmatpush1.msra.mxu0 %v181
    %187 = vmatprep.subr.mxu0 0.0
    %188 = vmatpush1.msra.mxu0 0.0
    %189 = vmatprep.subr.mxu0 0.0
    %190 = vmatpush1.msra.mxu0 0.0
    %191 = vmatprep.subr.mxu0 0.0
    %192 = vmatpush1.msra.mxu0 0.0
    %193 = vmatprep.subr.mxu0 0.0
    %194 = vmatpush1.msra.mxu0 0.0
    %195 = vmatprep.subr.mxu0 0.0
    %196 = vmatpush1.msra.mxu0 0.0
    %197 = vmatprep.subr.mxu0 0.0
    %198 = vmatpush1.msra.mxu0 0.0
    %199 = vmatprep.subr.mxu0 0.0
    %200 = vmatpush1.msra.mxu0 0.0
    %201 = vmatprep.subr.mxu0 0.0
    %202 = vmatpush1.msra.mxu0 0.0
    %203 = vmatprep.subr.mxu0 0.0
    %204 = vmatpush1.msra.mxu0 0.0
    %205 = vmatprep.subr.mxu0 0.0
    %206 = vmatpush1.msra.mxu0 0.0
    %207 = vmatprep.subr.mxu0 0.0
    %208 = vmatpush1.msra.mxu0 0.0
    %209 = vmatprep.subr.mxu0 0.0
    %210 = vmatpush1.msra.mxu0 0.0
    %211 = vmatprep.subr.mxu0 0.0
    %212 = vmatpush1.msra.mxu0 0.0
    %213 = vmatprep.subr.mxu0 0.0
    %214 = vmatpush1.msra.mxu0 0.0
    %215 = vmatprep.subr.mxu0 0.0
    %216 = vmatpush1.msra.mxu0 0.0
    %217 = vmatprep.subr.mxu0 0.0
    %218 = vmatpush1.msra.mxu0 0.0
    %219 = vmatprep.subr.mxu0 0.0
    %220 = vmatpush1.msra.mxu0 0.0
    %221 = vmatprep.subr.mxu0 0.0
    %222 = vmatpush1.msra.mxu0 0.0
    %223 = vmatprep.subr.mxu0 0.0
    %224 = vmatpush1.msra.mxu0 0.0
    %225 = vmatprep.subr.mxu0 0.0
    %226 = vmatpush1.msra.mxu0 0.0
    %227 = vmatprep.subr.mxu0 0.0
    %228 = vmatpush1.msra.mxu0 0.0
    %229 = vmatprep.subr.mxu0 0.0
    %230 = vmatpush1.msra.mxu0 0.0
    %231 = vmatprep.subr.mxu0 0.0
    %232 = vmatpush1.msra.mxu0 0.0
    %233 = vmatprep.subr.mxu0 0.0
    %234 = vmatpush1.msra.mxu0 0.0
    %235 = vmatprep.subr.mxu0 0.0
    %236 = vmatpush1.msra.mxu0 0.0
    %237 = vmatprep.subr.mxu0 0.0
    %238 = vmatpush1.msra.mxu0 0.0
    %239 = vmatprep.subr.mxu0 0.0
    %240 = vmatpush1.msra.mxu0 0.0
    %241 = vmatprep.subr.mxu0 0.0
    %242 = vmatpush1.msra.mxu0 0.0
    %243 = vmatprep.subr.mxu0 0.0
    %244 = vmatpush1.msra.mxu0 0.0
    %245 = vmatprep.subr.mxu0 0.0
    %246 = vmatpush1.msra.mxu0 0.0
    %247 = vmatprep.mubr.f32.mxu0 0.0
    %248 = vmatmul.mubr.f32.gmra.mrb[0].mxu0 %v178
    %v249 = vpop.f32.mrb[0].mxu0
    %v250 = vadd.f32 %v173, %v249
    %v251 = vpop.f32.mrb[0].mxu0
    %252 = vdwg.mxu0
    %v253 = vld [vmem:[%s4] sm:$0x1]
    %v255 = vlaneseq
    %v256 = vshrl.u32 %v255, 7
    %v257 = vsub.s32 0, %v256
    %v258 = vrot.slane %v253, %v257
    %v260 = vadd.f32 %v250, %v258
    %v261 = vmax.f32 %v260, 0.0
    %v262 = vld [vmem:[#allocation10] sm:$0xff]
    %v263 = vld [vmem:[#allocation10 + $0x8] sm:$0xff]
    %v264 = vld [vmem:[#allocation10 + $0x10] sm:$0xff]
    %v265 = vld [vmem:[#allocation10 + $0x18] sm:$0xff]
    %v266 = vld [vmem:[%s6] sm:$0x1]
    %v268 = vlaneseq
    %v269 = vshrl.u32 %v268, 7
    %v270 = vsub.s32 0, %v269
    %v271 = vrot.slane %v266, %v270
    %vm273 = vcmask 261120
    %v275 = vsel %vm273, %v261, 0
    %277 = vmatprep.subr.mxu0 0.0
    %278 = vmatpush1.msra.mxu0 %v262
    %279 = vmatprep.subr.mxu0 0.0
    %280 = vmatpush1.msra.mxu0 %v263
    %281 = vmatprep.subr.mxu0 0.0
    %282 = vmatpush1.msra.mxu0 %v264
    %283 = vmatprep.subr.mxu0 0.0
    %284 = vmatpush1.msra.mxu0 %v265
    %285 = vmatprep.subr.mxu0 0.0
    %286 = vmatpush1.msra.mxu0 0.0
    %287 = vmatprep.subr.mxu0 0.0
    %288 = vmatpush1.msra.mxu0 0.0
    %289 = vmatprep.subr.mxu0 0.0
    %290 = vmatpush1.msra.mxu0 0.0
    %291 = vmatprep.subr.mxu0 0.0
    %292 = vmatpush1.msra.mxu0 0.0
    %293 = vmatprep.subr.mxu0 0.0
    %294 = vmatpush1.msra.mxu0 0.0
    %295 = vmatprep.subr.mxu0 0.0
    %296 = vmatpush1.msra.mxu0 0.0
    %297 = vmatprep.subr.mxu0 0.0
    %298 = vmatpush1.msra.mxu0 0.0
    %299 = vmatprep.subr.mxu0 0.0
    %300 = vmatpush1.msra.mxu0 0.0
    %301 = vmatprep.subr.mxu0 0.0
    %302 = vmatpush1.msra.mxu0 0.0
    %303 = vmatprep.subr.mxu0 0.0
    %304 = vmatpush1.msra.mxu0 0.0
    %305 = vmatprep.subr.mxu0 0.0
    %306 = vmatpush1.msra.mxu0 0.0
    %307 = vmatprep.subr.mxu0 0.0
    %308 = vmatpush1.msra.mxu0 0.0
    %309 = vmatprep.subr.mxu0 0.0
    %310 = vmatpush1.msra.mxu0 0.0
    %311 = vmatprep.subr.mxu0 0.0
    %312 = vmatpush1.msra.mxu0 0.0
    %313 = vmatprep.subr.mxu0 0.0
    %314 = vmatpush1.msra.mxu0 0.0
    %315 = vmatprep.subr.mxu0 0.0
    %316 = vmatpush1.msra.mxu0 0.0
    %317 = vmatprep.subr.mxu0 0.0
    %318 = vmatpush1.msra.mxu0 0.0
    %319 = vmatprep.subr.mxu0 0.0
    %320 = vmatpush1.msra.mxu0 0.0
    %321 = vmatprep.subr.mxu0 0.0
    %322 = vmatpush1.msra.mxu0 0.0
    %323 = vmatprep.subr.mxu0 0.0
    %324 = vmatpush1.msra.mxu0 0.0
    %325 = vmatprep.subr.mxu0 0.0
    %326 = vmatpush1.msra.mxu0 0.0
    %327 = vmatprep.subr.mxu0 0.0
    %328 = vmatpush1.msra.mxu0 0.0
    %329 = vmatprep.subr.mxu0 0.0
    %330 = vmatpush1.msra.mxu0 0.0
    %331 = vmatprep.subr.mxu0 0.0
    %332 = vmatpush1.msra.mxu0 0.0
    %333 = vmatprep.subr.mxu0 0.0
    %334 = vmatpush1.msra.mxu0 0.0
    %335 = vmatprep.subr.mxu0 0.0
    %336 = vmatpush1.msra.mxu0 0.0
    %337 = vmatprep.subr.mxu0 0.0
    %338 = vmatpush1.msra.mxu0 0.0
    %339 = vmatprep.subr.mxu0 0.0
    %340 = vmatpush1.msra.mxu0 0.0
    %341 = vmatprep.mubr.f32.mxu0 0.0
    %342 = vmatmul.mubr.f32.gmra.mrb[0].mxu0 %v275
    %v343 = vpop.f32.mrb[0].mxu0
    %v344 = vadd.f32 %v271, %v343
    %v345 = vpop.f32.mrb[0].mxu0
    %346 = vdwg.mxu0
    %347 = vst [vmem:[#allocation11] sm:$0xff] %v344
    // Predicated region
    $region50: #{tpu_custom_call.1} parent=1 // pred_check
      _
    $region51: #{tpu_custom_call.1} parent=1 // pred_check_branch
      %349 = sbr.rel (0) target = $region53
    $region52: #{tpu_custom_call.1} parent=1 // pred_region
      %s351 = ssub.s32 128, 128
      %352 = vsyncadd [#allocation4], %s351
      %s354 = sshll.u32 [#allocation11], 4
      %s355 = int_to_ptr.vmem [resolvable:$true] %s354
      %357 = dma.vmem_to_hbm [thread:$0]  %s355, 128, %s7, [#allocation4]
    $region53: #{tpu_custom_call.1} parent=1 // pred_fallthru
      _
    // Predicated region
    $region54: #{tpu_custom_call.1} parent=1 // pred_check
      _
    $region55: #{tpu_custom_call.1} parent=1 // pred_check_branch
      %359 = sbr.rel (0) target = $region57
    $region56: #{tpu_custom_call.1} parent=1 // pred_region
      %360 = dma.done [#allocation4], 128
    $region57: #{tpu_custom_call.1} parent=1 // pred_fallthru
      _
    %361 = vsyncpa [#allocation3], 1
    %362 = vsyncpa [#allocation6], 1
    %363 = vsyncpa [#allocation9], 1
    %364 = vsyncpa [#allocation4], 1

</llo_original>
